<compile_context>
chip_gen: v5e
topology: v5e:2x2
jax: 0.10.0
libtpu: 0.0.40
codegen_flags: <defaults>
</compile_context>

<pallas_src>
import functools

import jax
import jax.numpy as jnp
from jax.experimental import pallas as pl
from jax.experimental.pallas import tpu as pltpu

LANE = 128
SUBLANE = 8
MAX_TILE_B = 512


def _round_up(n: int, m: int) -> int:
    return ((n + m - 1) // m) * m


def _choose_tile_b(batch: int) -> int:
    """Adaptive batch tile: tiny batches -> one small tile; larger batches ->
    >= 2 grid steps (megacore) with tiles capped at MAX_TILE_B rows."""
    bp8 = _round_up(batch, SUBLANE)
    if bp8 <= SUBLANE:
        return bp8
    return min(MAX_TILE_B, _round_up((bp8 + 1) // 2, SUBLANE))


def _sigmoid_f32(z):
    # sigmoid(z) == 0.5*tanh(0.5*z) + 0.5 : single EUP transcendental per vreg.
    return 0.5 * jnp.tanh(0.5 * z) + 0.5


def mlp_kernel(x_ref, w1_ref, b1_ref, w2_ref, b2_ref, o_ref):
    # x_ref: f32 (tile_b, d_in); w1/w2: bf16 (resident); b1/b2: f32; o_ref: f32.
    x = x_ref[...].astype(w1_ref.dtype)                       # in-kernel bf16 downcast
    h = jnp.dot(x, w1_ref[...], preferred_element_type=jnp.float32)
    h = _sigmoid_f32(h + b1_ref[...])                         # f32 bias + sigmoid
    y = jnp.dot(h.astype(w2_ref.dtype), w2_ref[...],          # bf16 downcast for MXU
                preferred_element_type=jnp.float32)
    o_ref[...] = _sigmoid_f32(y + b2_ref[...]).astype(o_ref.dtype)


def prepare_params(w1, b1, w2, b2, mxu_dtype=jnp.bfloat16):
    """One-time (call-invariant) pad + cast of the weights.

    w1: (d_in, H1), b1: (1, H1), w2: (H1, d_out), b2: (1, d_out)
    (weights stored transposed relative to PyTorch nn.Linear: (in, out) layout).

    Zero-padding of w2's extra rows is REQUIRED for correctness: padded hidden
    lanes evaluate to sigmoid(0)=0.5 but multiply those zero rows, so they cancel.
    """
    d_in, H1 = w1.shape
    d_out = w2.shape[1]
    H1_p = _round_up(H1, LANE)
    d_out_p = _round_up(d_out, LANE)

    w1p = jnp.pad(w1, ((0, 0), (0, H1_p - H1))).astype(mxu_dtype)
    b1p = jnp.pad(b1, ((0, 0), (0, H1_p - H1))).astype(jnp.float32)
    w2p = jnp.pad(w2, ((0, H1_p - H1), (0, d_out_p - d_out))).astype(mxu_dtype)
    b2p = jnp.pad(b2, ((0, 0), (0, d_out_p - d_out))).astype(jnp.float32)
    return w1p, b1p, w2p, b2p, d_out


def _vmem_limit_bytes(tile_b, d_in, H1_p, d_out_p):
    weights = (d_in * H1_p + H1_p * d_out_p) * 2 + (H1_p + d_out_p) * 4  # single-buffered
    x_bufs = 2 * tile_b * d_in * 4                                        # f32, double-buffered
    out_bufs = 2 * tile_b * d_out_p * 4                                   # f32, double-buffered
    live = tile_b * H1_p * 4 + tile_b * max(H1_p, d_out_p) * 4            # f32 intermediates
    need = weights + x_bufs + out_bufs + live
    return max(16 << 20, min(64 << 20, int(1.5 * need) + (2 << 20)))


@functools.partial(jax.jit, static_argnames=("d_out",))
def nn_forward(x, w1p, b1p, w2p, b2p, *, d_out):
    """Forward pass of NN: sigmoid(sigmoid(x @ W1 + b1) @ W2 + b2).

    x: (B, d_in) float32.  w1p/b1p/w2p/b2p come from prepare_params (already
    lane-padded and cast); the result is sliced back to (B, d_out).
    """
    B, d_in = x.shape
    H1_p = w1p.shape[1]
    d_out_p = w2p.shape[1]
    out_dtype = x.dtype

    tile_b = _choose_tile_b(B)
    Bp = _round_up(B, tile_b)
    xp = x if Bp == B else jnp.pad(x, ((0, Bp - B), (0, 0)))
    grid = (Bp // tile_b,)

    resident = functools.partial(pl.BlockSpec, pipeline_mode=pl.Buffered(1))

    out_p = pl.pallas_call(
        mlp_kernel,
        out_shape=jax.ShapeDtypeStruct((Bp, d_out_p), out_dtype),
        grid_spec=pltpu.PrefetchScalarGridSpec(
            num_scalar_prefetch=0,
            grid=grid,
            in_specs=[
                # x tile moves with the batch grid index (f32, cast in-kernel).
                pl.BlockSpec((tile_b, d_in), lambda i: (i, 0)),
                # Weights / biases: constant index map + single buffer -> VMEM-resident.
                resident((d_in, H1_p), lambda i: (0, 0)),
                resident((1, H1_p), lambda i: (0, 0)),
                resident((H1_p, d_out_p), lambda i: (0, 0)),
                resident((1, d_out_p), lambda i: (0, 0)),
            ],
            out_specs=pl.BlockSpec((tile_b, d_out_p), lambda i: (i, 0)),
        ),
        compiler_params=pltpu.CompilerParams(
            dimension_semantics=("parallel",),
            vmem_limit_bytes=_vmem_limit_bytes(tile_b, d_in, H1_p, d_out_p),
        ),
    )(xp, w1p, b1p, w2p, b2p)

    return out_p[:B, :d_out]


def init_params(key, input_size, H1, output_size, dtype=jnp.float32):
    # Mimics PyTorch nn.Linear default init: U[-1/sqrt(fan_in), +1/sqrt(fan_in)].
    k1, k2, k3, k4 = jax.random.split(key, 4)
    lim1 = 1.0 / jnp.sqrt(jnp.float32(input_size))
    lim2 = 1.0 / jnp.sqrt(jnp.float32(H1))
    # Stored as (in, out): equivalent to PyTorch weight (out, in) transposed.
    w1 = jax.random.uniform(k1, (input_size, H1), dtype, -lim1, lim1)
    b1 = jax.random.uniform(k2, (1, H1), dtype, -lim1, lim1)
    w2 = jax.random.uniform(k3, (H1, output_size), dtype, -lim2, lim2)
    b2 = jax.random.uniform(k4, (1, output_size), dtype, -lim2, lim2)
    return w1, b1, w2, b2


if __name__ == "__main__":
    key = jax.random.PRNGKey(0)
    kx, kp = jax.random.split(key)

    batch, input_size, H1, output_size = 8, 32, 64, 16
    x = jax.random.normal(kx, (batch, input_size), jnp.float32)
    w1, b1, w2, b2 = init_params(kp, input_size, H1, output_size)

    # One-time weight preparation (pad + bf16 cast), then the fused forward.
    w1p, b1p, w2p, b2p, d_out = prepare_params(w1, b1, w2, b2)
    out = nn_forward(x, w1p, b1p, w2p, b2p, d_out=d_out)
    jax.block_until_ready(out)

    # Pure-JAX f32 reference; tolerance sized for bf16 MXU inputs (f32 accumulation).
    ref = jax.nn.sigmoid(jax.nn.sigmoid(x @ w1 + b1) @ w2 + b2)
    assert out.shape == (batch, output_size)
    assert jnp.allclose(out, ref, atol=2e-2, rtol=2e-2), float(jnp.abs(out - ref).max())

    print("KERNEL_OK")
</pallas_src>

<mosaic_0001>
module attributes {stable_mosaic.version = 11 : i64} {
  func.func @mlp_kernel(%arg0: i32, %arg1: memref<8x32xf32, #tpu.memory_space<vmem>>, %arg2: memref<32x128xbf16, #tpu.memory_space<vmem>>, %arg3: memref<1x128xf32, #tpu.memory_space<vmem>>, %arg4: memref<128x128xbf16, #tpu.memory_space<vmem>>, %arg5: memref<1x128xf32, #tpu.memory_space<vmem>>, %arg6: memref<8x128xf32, #tpu.memory_space<vmem>>) attributes {dimension_semantics = [#tpu.dimension_semantics<parallel>], iteration_bounds = array<i64: 1>, scalar_prefetch = 0 : i64, scratch_operands = 0 : i64, tpu.core_type = #tpu.core_type<tc>, window_params = [{transform_indices = @transform_0, window_bounds = array<i64: 8, 32>}, {pipeline_mode = #tpu.pipeline_mode<synchronous>, transform_indices = @transform_1, window_bounds = array<i64: 32, 128>}, {pipeline_mode = #tpu.pipeline_mode<synchronous>, transform_indices = @transform_2, window_bounds = array<i64: 1, 128>}, {pipeline_mode = #tpu.pipeline_mode<synchronous>, transform_indices = @transform_3, window_bounds = array<i64: 128, 128>}, {pipeline_mode = #tpu.pipeline_mode<synchronous>, transform_indices = @transform_4, window_bounds = array<i64: 1, 128>}, {transform_indices = @transform_5, window_bounds = array<i64: 8, 128>}]} {
    %c0 = arith.constant 0 : index
    %c0_0 = arith.constant 0 : index
    %0 = vector.load %arg1[%c0, %c0_0] : memref<8x32xf32, #tpu.memory_space<vmem>>, vector<8x32xf32>
    %1 = arith.truncf %0 : vector<8x32xf32> to vector<8x32xbf16>
    %c0_1 = arith.constant 0 : index
    %c0_2 = arith.constant 0 : index
    %2 = vector.load %arg2[%c0_1, %c0_2] : memref<32x128xbf16, #tpu.memory_space<vmem>>, vector<32x128xbf16>
    %cst = arith.constant dense<0.000000e+00> : vector<8x128xf32>
    %3 = tpu.matmul %1, %2, %cst {dimension_numbers = #tpu.dot_dimension_numbers<[1], [0], [0], [1], [0, 0, 1, 1], [], []>} : vector<8x32xbf16>, vector<32x128xbf16>, vector<8x128xf32> -> vector<8x128xf32>
    %c0_3 = arith.constant 0 : index
    %c0_4 = arith.constant 0 : index
    %4 = vector.load %arg3[%c0_3, %c0_4] : memref<1x128xf32, #tpu.memory_space<vmem>>, vector<1x128xf32>
    %5 = vector.broadcast %4 : vector<1x128xf32> to vector<8x128xf32>
    %6 = arith.addf %3, %5 : vector<8x128xf32>
    %cst_5 = arith.constant 5.000000e-01 : f32
    %7 = vector.broadcast %cst_5 : f32 to vector<8x128xf32>
    %8 = arith.mulf %7, %6 : vector<8x128xf32>
    %9 = math.tanh %8 : vector<8x128xf32>
    %cst_6 = arith.constant 5.000000e-01 : f32
    %10 = vector.broadcast %cst_6 : f32 to vector<8x128xf32>
    %11 = arith.mulf %10, %9 : vector<8x128xf32>
    %cst_7 = arith.constant 5.000000e-01 : f32
    %12 = vector.broadcast %cst_7 : f32 to vector<8x128xf32>
    %13 = arith.addf %11, %12 : vector<8x128xf32>
    %14 = arith.truncf %13 : vector<8x128xf32> to vector<8x128xbf16>
    %c0_8 = arith.constant 0 : index
    %c0_9 = arith.constant 0 : index
    %15 = vector.load %arg4[%c0_8, %c0_9] : memref<128x128xbf16, #tpu.memory_space<vmem>>, vector<128x128xbf16>
    %cst_10 = arith.constant dense<0.000000e+00> : vector<8x128xf32>
    %16 = tpu.matmul %14, %15, %cst_10 {dimension_numbers = #tpu.dot_dimension_numbers<[1], [0], [0], [1], [0, 0, 1, 1], [], []>} : vector<8x128xbf16>, vector<128x128xbf16>, vector<8x128xf32> -> vector<8x128xf32>
    %c0_11 = arith.constant 0 : index
    %c0_12 = arith.constant 0 : index
    %17 = vector.load %arg5[%c0_11, %c0_12] : memref<1x128xf32, #tpu.memory_space<vmem>>, vector<1x128xf32>
    %18 = vector.broadcast %17 : vector<1x128xf32> to vector<8x128xf32>
    %19 = arith.addf %16, %18 : vector<8x128xf32>
    %cst_13 = arith.constant 5.000000e-01 : f32
    %20 = vector.broadcast %cst_13 : f32 to vector<8x128xf32>
    %21 = arith.mulf %20, %19 : vector<8x128xf32>
    %22 = math.tanh %21 : vector<8x128xf32>
    %cst_14 = arith.constant 5.000000e-01 : f32
    %23 = vector.broadcast %cst_14 : f32 to vector<8x128xf32>
    %24 = arith.mulf %23, %22 : vector<8x128xf32>
    %cst_15 = arith.constant 5.000000e-01 : f32
    %25 = vector.broadcast %cst_15 : f32 to vector<8x128xf32>
    %26 = arith.addf %24, %25 : vector<8x128xf32>
    %c0_16 = arith.constant 0 : index
    %c0_17 = arith.constant 0 : index
    %27 = vector.load %arg6[%c0_16, %c0_17] : memref<8x128xf32, #tpu.memory_space<vmem>>, vector<8x128xf32>
    tpu.vector_store %arg6[%c0_16, %c0_17], %26 {strides = array<i32>} : memref<8x128xf32, #tpu.memory_space<vmem>>, vector<8x128xf32>,
    return
  }
  func.func @transform_0(%arg0: i32) -> (i32, i32) {
    %c0_i32 = arith.constant 0 : i32
    %c0_i32_0 = arith.constant 0 : i32
    return %arg0, %c0_i32 : i32, i32
  }
  func.func @transform_1(%arg0: i32) -> (i32, i32) {
    %c0_i32 = arith.constant 0 : i32
    %c0_i32_0 = arith.constant 0 : i32
    %c0_i32_1 = arith.constant 0 : i32
    return %c0_i32, %c0_i32_0 : i32, i32
  }
  func.func @transform_2(%arg0: i32) -> (i32, i32) {
    %c0_i32 = arith.constant 0 : i32
    %c0_i32_0 = arith.constant 0 : i32
    %c0_i32_1 = arith.constant 0 : i32
    return %c0_i32, %c0_i32_0 : i32, i32
  }
  func.func @transform_3(%arg0: i32) -> (i32, i32) {
    %c0_i32 = arith.constant 0 : i32
    %c0_i32_0 = arith.constant 0 : i32
    %c0_i32_1 = arith.constant 0 : i32
    return %c0_i32, %c0_i32_0 : i32, i32
  }
  func.func @transform_4(%arg0: i32) -> (i32, i32) {
    %c0_i32 = arith.constant 0 : i32
    %c0_i32_0 = arith.constant 0 : i32
    %c0_i32_1 = arith.constant 0 : i32
    return %c0_i32, %c0_i32_0 : i32, i32
  }
  func.func @transform_5(%arg0: i32) -> (i32, i32) {
    %c0_i32 = arith.constant 0 : i32
    %c0_i32_0 = arith.constant 0 : i32
    return %arg0, %c0_i32 : i32, i32
  }
}

</mosaic_0001>

<llo_original>
// kernel: nn_forward.1
$region0: #{nn_forward.1}
  #allocation0 [shape = 'u32[]', space=smem, size = 0x4, offset = 0x4, fixed_abs, tag = 'smem constant byte address 0x4 - core index']
  #allocation1 [shape = 'u32[72,128]{1,0:T(1,128)}', space=vmem, size = 0x9000, scoped, tag = 'internal scratch']
  %s0 = inlined_call_operand.hbm [shape: f32[8,32], index: 0, kind: input, shape index: {}]
  %s1 = inlined_call_operand.hbm [shape: bf16[32,128], index: 1, kind: input, shape index: {}]
  %s2 = inlined_call_operand.vmem [shape: f32[1,128], index: 2, kind: input, shape index: {}]
  %s3 = inlined_call_operand.hbm [shape: bf16[128,128], index: 3, kind: input, shape index: {}]
  %s4 = inlined_call_operand.vmem [shape: f32[1,128], index: 4, kind: input, shape index: {}]
  %s5 = inlined_call_operand.hbm [shape: f32[8,128], index: 5, kind: output, shape index: {}]
  %s6 = sld [smem:[#allocation0]]
  $region42: #{nn_forward.1} parent=0
    _
  %s8 = ssub.s32 1, %s6
  %s9 = scalar_select 0, %s8, %s6
  $region1: #{nn_forward.1} parent=0
    #allocation2 [shape = 'u8[4096]{0}', space=vmem, size = 0x1000, scoped, tag = 'input window, operand 0, single buffered']
    #allocation3 [shape = 's32[1]{0}', space=sflag, size = 0x4, scoped, tag = 'scoped memory for nn_forward.1']
    #allocation4 [shape = 's32[1]{0}', space=sflag, size = 0x4, scoped, tag = 'scoped memory for nn_forward.1']
    #allocation5 [shape = 'u8[8192]{0}', space=vmem, size = 0x2000, scoped, tag = 'input window, operand 1, single buffered']
    #allocation6 [shape = 's32[1]{0}', space=sflag, size = 0x4, scoped, tag = 'scoped memory for nn_forward.1']
    #allocation7 [shape = 'u8[32768]{0}', space=vmem, size = 0x8000, scoped, tag = 'input window, operand 3, single buffered']
    #allocation8 [shape = 'u8[4096]{0}', space=vmem, size = 0x1000, scoped, tag = 'output window, operand 0, single buffered']
    %10 = vsyncpa [#allocation3], 0
    %11 = vsyncpa [#allocation6], 0
    %12 = vsyncpa [#allocation4], 0
    // Predicated region
    $region2: #{nn_forward.1} parent=1 // pred_check
      _
    $region3: #{nn_forward.1} parent=1 // pred_check_branch
      %14 = sbr.rel (0) target = $region5
    $region4: #{nn_forward.1} parent=1 // pred_region
      %16 = vsyncadd [#allocation3], 0
      %s18 = sshll.u32 %s0, 4
      %s19 = int_to_ptr.hbm [resolvable:$true] %s18
      %s20 = sshll.u32 [#allocation2], 4
      %s21 = int_to_ptr.vmem [resolvable:$true] %s20
      %23 = dma.hbm_to_vmem [thread:$0]  %s19, 128, %s21, [#allocation3]
    $region5: #{nn_forward.1} parent=1 // pred_fallthru
      _
    // Predicated region
    $region6: #{nn_forward.1} parent=1 // pred_check
      _
    $region7: #{nn_forward.1} parent=1 // pred_check_branch
      %25 = sbr.rel (0) target = $region9
    $region8: #{nn_forward.1} parent=1 // pred_region
      %27 = vsyncadd [#allocation6], 0
      %s28 = sshll.u32 %s1, 4
      %s29 = int_to_ptr.hbm [resolvable:$true] %s28
      %s30 = sshll.u32 [#allocation5], 4
      %s31 = int_to_ptr.vmem [resolvable:$true] %s30
      %36 = dma.hbm_to_vmem [thread:$0]  %s29, 256, %s31, [#allocation6], 64, 64, 4
    $region9: #{nn_forward.1} parent=1 // pred_fallthru
      _
    // Predicated region
    $region10: #{nn_forward.1} parent=1 // pred_check
      _
    $region11: #{nn_forward.1} parent=1 // pred_check_branch
      %38 = sbr.rel (0) target = $region13
    $region12: #{nn_forward.1} parent=1 // pred_region
      _
    $region13: #{nn_forward.1} parent=1 // pred_fallthru
      _
    // Predicated region
    $region14: #{nn_forward.1} parent=1 // pred_check
      _
    $region15: #{nn_forward.1} parent=1 // pred_check_branch
      %40 = sbr.rel (0) target = $region17
    $region16: #{nn_forward.1} parent=1 // pred_region
      %42 = vsyncadd [#allocation6], 0
      %s43 = sshll.u32 %s3, 4
      %s44 = int_to_ptr.hbm [resolvable:$true] %s43
      %s45 = sshll.u32 [#allocation7], 4
      %s46 = int_to_ptr.vmem [resolvable:$true] %s45
      %51 = dma.hbm_to_vmem [thread:$0]  %s44, 1024, %s46, [#allocation6], 64, 64, 4
    $region17: #{nn_forward.1} parent=1 // pred_fallthru
      _
    // Predicated region
    $region18: #{nn_forward.1} parent=1 // pred_check
      _
    $region19: #{nn_forward.1} parent=1 // pred_check_branch
      %53 = sbr.rel (0) target = $region21
    $region20: #{nn_forward.1} parent=1 // pred_region
      _
    $region21: #{nn_forward.1} parent=1 // pred_fallthru
      _
    // Predicated region
    $region22: #{nn_forward.1} parent=1 // pred_check
      _
    $region23: #{nn_forward.1} parent=1 // pred_check_branch
      %55 = sbr.rel (0) target = $region25
    $region24: #{nn_forward.1} parent=1 // pred_region
      %57 = dma.done [#allocation3], 128
    $region25: #{nn_forward.1} parent=1 // pred_fallthru
      _
    // Predicated region
    $region26: #{nn_forward.1} parent=1 // pred_check
      _
    $region27: #{nn_forward.1} parent=1 // pred_check_branch
      %59 = sbr.rel (0) target = $region29
    $region28: #{nn_forward.1} parent=1 // pred_region
      %61 = dma.done [#allocation6], 256
    $region29: #{nn_forward.1} parent=1 // pred_fallthru
      _
    // Predicated region
    $region30: #{nn_forward.1} parent=1 // pred_check
      _
    $region31: #{nn_forward.1} parent=1 // pred_check_branch
      %63 = sbr.rel (0) target = $region33
    $region32: #{nn_forward.1} parent=1 // pred_region
      %65 = dma.done [#allocation6], 1024
    $region33: #{nn_forward.1} parent=1 // pred_fallthru
      _
    %v67 = vld [vmem:[#allocation2] sm:$0xff]
    %v68 = vpack.c.bf16 %v67, %v67
    %v69 = vld [vmem:[#allocation5] sm:$0xf]
    %v70 = vld [vmem:[#allocation5 + $0x4] sm:$0xf]
    %v71 = vld [vmem:[#allocation5 + $0x8] sm:$0xf]
    %v72 = vld [vmem:[#allocation5 + $0xc] sm:$0xf]
    %v73 = vld [vmem:[%s2] sm:$0x1]
    %v75 = vperm.slane %v73, 0
    %v81 = vunpack.c.l.b16 %v69
    %v82 = vunpack.c.l.b16 %v70
    %v83 = vunpack.c.l.b16 %v71
    %v84 = vunpack.c.l.b16 %v72
    %v85 = vpack.c.b16 %v82, %v81
    %v86 = vpack.c.b16 %v84, %v83
    %vm89 = vcmask 261120
    %v91 = vsel %vm89, %v68, 0
    %93 = vmatpush.bf16.msra.mxu0 0
    %94 = vmatpush.bf16.msra.mxu0 0
    %95 = vmatpush.bf16.msra.mxu0 0
    %96 = vmatpush.bf16.msra.mxu0 0
    %97 = vmatpush.bf16.msra.mxu0 0
    %98 = vmatpush.bf16.msra.mxu0 0
    %99 = vmatpush.bf16.msra.mxu0 %v86
    %100 = vmatpush.bf16.msra.mxu0 %v85
    %101 = vmatmul.bf16.gmra.mxu0 %v91
    %v102 = vpop.f32.mrf.mxu0
    %v103 = vadd.f32 %v75, %v102
    %v104 = vpop.f32.mrf.mxu0
    %105 = vdwg.mxu0
    %v106 = vmul.f32 %v103, 0.5
    %v107 = vtanh.pop %v106
    %v108 = vmul.f32 %v107, 0.5
    %v109 = vadd.f32 %v108, 0.5
    %v110 = vpack.c.bf16 %v109, %v109
    %v111 = vld [vmem:[#allocation7] sm:$0xf]
    %v112 = vld [vmem:[#allocation7 + $0x4] sm:$0xf]
    %v113 = vld [vmem:[#allocation7 + $0x8] sm:$0xf]
    %v114 = vld [vmem:[#allocation7 + $0xc] sm:$0xf]
    %v115 = vld [vmem:[#allocation7 + $0x10] sm:$0xf]
    %v116 = vld [vmem:[#allocation7 + $0x14] sm:$0xf]
    %v117 = vld [vmem:[#allocation7 + $0x18] sm:$0xf]
    %v118 = vld [vmem:[#allocation7 + $0x1c] sm:$0xf]
    %v119 = vld [vmem:[#allocation7 + $0x20] sm:$0xf]
    %v120 = vld [vmem:[#allocation7 + $0x24] sm:$0xf]
    %v121 = vld [vmem:[#allocation7 + $0x28] sm:$0xf]
    %v122 = vld [vmem:[#allocation7 + $0x2c] sm:$0xf]
    %v123 = vld [vmem:[#allocation7 + $0x30] sm:$0xf]
    %v124 = vld [vmem:[#allocation7 + $0x34] sm:$0xf]
    %v125 = vld [vmem:[#allocation7 + $0x38] sm:$0xf]
    %v126 = vld [vmem:[#allocation7 + $0x3c] sm:$0xf]
    %v127 = vld [vmem:[%s4] sm:$0x1]
    %v129 = vperm.slane %v127, 0
    %v147 = vunpack.c.l.b16 %v111
    %v148 = vunpack.c.l.b16 %v112
    %v149 = vunpack.c.l.b16 %v113
    %v150 = vunpack.c.l.b16 %v114
    %v151 = vunpack.c.l.b16 %v115
    %v152 = vunpack.c.l.b16 %v116
    %v153 = vunpack.c.l.b16 %v117
    %v154 = vunpack.c.l.b16 %v118
    %v155 = vunpack.c.l.b16 %v119
    %v156 = vunpack.c.l.b16 %v120
    %v157 = vunpack.c.l.b16 %v121
    %v158 = vunpack.c.l.b16 %v122
    %v159 = vunpack.c.l.b16 %v123
    %v160 = vunpack.c.l.b16 %v124
    %v161 = vunpack.c.l.b16 %v125
    %v162 = vunpack.c.l.b16 %v126
    %v163 = vpack.c.b16 %v148, %v147
    %v164 = vpack.c.b16 %v150, %v149
    %v165 = vpack.c.b16 %v152, %v151
    %v166 = vpack.c.b16 %v154, %v153
    %v167 = vpack.c.b16 %v156, %v155
    %v168 = vpack.c.b16 %v158, %v157
    %v169 = vpack.c.b16 %v160, %v159
    %v170 = vpack.c.b16 %v162, %v161
    %179 = vmatpush.bf16.msra.mxu0 %v170
    %180 = vmatpush.bf16.msra.mxu0 %v169
    %181 = vmatpush.bf16.msra.mxu0 %v168
    %182 = vmatpush.bf16.msra.mxu0 %v167
    %183 = vmatpush.bf16.msra.mxu0 %v166
    %184 = vmatpush.bf16.msra.mxu0 %v165
    %185 = vmatpush.bf16.msra.mxu0 %v164
    %186 = vmatpush.bf16.msra.mxu0 %v163
    %187 = vmatmul.bf16.gmra.mxu0 %v110
    %v188 = vpop.f32.mrf.mxu0
    %v189 = vadd.f32 %v129, %v188
    %v190 = vpop.f32.mrf.mxu0
    %191 = vdwg.mxu0
    %v192 = vmul.f32 %v189, 0.5
    %v193 = vtanh.pop %v192
    %v194 = vmul.f32 %v193, 0.5
    %v195 = vadd.f32 %v194, 0.5
    %196 = vst [vmem:[#allocation8] sm:$0xff] %v195
    // Predicated region
    $region34: #{nn_forward.1} parent=1 // pred_check
      _
    $region35: #{nn_forward.1} parent=1 // pred_check_branch
      %198 = sbr.rel (0) target = $region37
    $region36: #{nn_forward.1} parent=1 // pred_region
      %200 = vsyncadd [#allocation4], 0
      %s202 = sshll.u32 [#allocation8], 4
      %s203 = int_to_ptr.vmem [resolvable:$true] %s202
      %s204 = sshll.u32 %s5, 4
      %s205 = int_to_ptr.hbm [resolvable:$true] %s204
      %207 = dma.vmem_to_hbm [thread:$0]  %s203, 128, %s205, [#allocation4]
    $region37: #{nn_forward.1} parent=1 // pred_fallthru
      _
    // Predicated region
    $region38: #{nn_forward.1} parent=1 // pred_check
      _
    $region39: #{nn_forward.1} parent=1 // pred_check_branch
      %209 = sbr.rel (0) target = $region41
    $region40: #{nn_forward.1} parent=1 // pred_region
      %211 = dma.done [#allocation4], 128
    $region41: #{nn_forward.1} parent=1 // pred_fallthru
      _
    %212 = vsyncpa [#allocation3], 1
    %213 = vsyncpa [#allocation6], 1
    %214 = vsyncpa [#allocation4], 1

</llo_original>
